<compile_context>
chip_gen: v7x
topology: tpu7x:2x2x1
jax: 0.10.0
libtpu: 0.0.40
codegen_flags: <defaults>
</compile_context>

<pallas_src>
import functools
import math

import jax
import jax.numpy as jnp
from jax.experimental import pallas as pl
from jax.experimental.pallas import tpu as pltpu

_MIB = 1024 * 1024


def _round_up(x, m):
    return (x + m - 1) // m * m


def _recip(d):
    # EUP approximate reciprocal + two Newton-Raphson refinements: keeps the
    # divide off the VALU while staying at ~f32 accuracy (tiny vectors only).
    r = pl.reciprocal(d, approx=True)
    r = r * (2.0 - d * r)
    r = r * (2.0 - d * r)
    return r


# ----------------------------- fused path ----------------------------------


def _fused_kernel(x_ref, w_ref, b_ref, o_ref, *, inv_hw, weight_mode):
    # x_ref: (1, C, HWp) native dtype; w_ref: (C, C); b_ref: (C, 1).
    x = x_ref[0]                                                  # (C, HWp)
    # Zero-padded lanes contribute 0 to the sum; divide by the true H*W.
    pooled = jnp.sum(x.astype(jnp.float32), axis=1, keepdims=True) * inv_hw
    y = jnp.dot(w_ref[...].astype(jnp.float32), pooled,
                preferred_element_type=jnp.float32) + b_ref[...].astype(jnp.float32)
    if weight_mode == 'softmax':
        m = jnp.max(y, axis=0, keepdims=True)
        e = jnp.exp(y - m)
        scale = e * _recip(jnp.sum(e, axis=0, keepdims=True))
    else:  # sigmoid
        scale = _recip(1.0 + jnp.exp(-y))
    # Final multiply stays in the input dtype (halves vreg/VALU work for bf16).
    o_ref[0] = x * scale.astype(x.dtype)


# ----------------------------- tiled path -----------------------------------


def _pool_kernel(x_ref, psum_ref):
    # grid = (N, hw_tiles); psum block is revisited across the (last) tile axis.
    @pl.when(pl.program_id(1) == 0)
    def _():
        psum_ref[...] = jnp.zeros_like(psum_ref)

    psum_ref[0] += jnp.sum(x_ref[0].astype(jnp.float32), axis=1, keepdims=True)


def _scale_kernel(p_ref, wt_ref, b_ref, s_ref, *, inv_hw, weight_mode):
    # Lane-dense, batched 1x1 conv + activation: (N, C) @ Wt(C, C) + (1, C),
    # softmax as a cheap lane-axis reduction.
    pooled = p_ref[...] * inv_hw                                  # (N, C) f32
    y = jnp.dot(pooled, wt_ref[...].astype(jnp.float32),
                preferred_element_type=jnp.float32) + b_ref[...].astype(jnp.float32)
    if weight_mode == 'softmax':
        m = jnp.max(y, axis=1, keepdims=True)
        e = jnp.exp(y - m)
        s = e * _recip(jnp.sum(e, axis=1, keepdims=True))
    else:
        s = _recip(1.0 + jnp.exp(-y))
    s_ref[...] = s


def _apply_kernel(x_ref, s_ref, o_ref):
    x = x_ref[0]                                # (C, T) native dtype
    o_ref[0] = x * s_ref[0].astype(x.dtype)     # s_ref[0]: (C, 1) per-channel scale


# ------------------------------ wrapper --------------------------------------


def _pick_hw_tile(hw_p, c, itemsize, budget_bytes):
    # Live VMEM in the streaming kernels ~= 4 * C * T * itemsize (double-
    # buffered input + output blocks); keep it under budget_bytes, prefer
    # 512-1024-wide lane tiles (>=85% of HBM roofline).
    cap = max(budget_bytes // (4 * c * itemsize), 128)
    cap = min(cap, 1024, hw_p)
    for t in (1024, 896, 768, 640, 512, 384, 256, 128):
        if t <= cap and hw_p % t == 0:
            return t
    return 128


def _vmem_limit(live_bytes):
    # Explicit scoped-VMEM request: 2x the estimate, clamped to a range valid
    # on v5e/v6e (128 MiB physical) and v7x (64 MiB physical).
    return int(min(max(2 * live_bytes, 8 * _MIB), 48 * _MIB))


def channel_attention(x, w, b, *, weight_mode='softmax', force_tiled=False,
                      vmem_budget_bytes=8 * _MIB):
    """SE-style channel attention.  x: (N, C, H, W); w: (C, C); b: (C,)."""
    assert weight_mode in ('softmax', 'sigmoid')
    N, C, H, W = x.shape
    HW = H * W
    HW_p = _round_up(HW, 128)            # lane axis must be a multiple of 128
    itemsize = jnp.dtype(x.dtype).itemsize
    w_itemsize = jnp.dtype(w.dtype).itemsize
    inv_hw = 1.0 / float(HW)

    xr = x.reshape(N, C, HW)
    if HW_p != HW:
        # Zero padding keeps the pooled sum exact (we divide by the true HW).
        xr = jnp.pad(xr, ((0, 0), (0, 0), (0, HW_p - HW)))

    fused_live = (4 * C * HW_p * itemsize          # 2x in + 2x out buffers
                  + 2 * C * C * w_itemsize + 2 * C * w_itemsize)
    use_fused = (not force_tiled) and fused_live <= vmem_budget_bytes

    if use_fused:
        out = pl.pallas_call(
            functools.partial(_fused_kernel, inv_hw=inv_hw, weight_mode=weight_mode),
            out_shape=jax.ShapeDtypeStruct((N, C, HW_p), x.dtype),
            grid_spec=pltpu.PrefetchScalarGridSpec(
                num_scalar_prefetch=0,
                grid=(N,),
                in_specs=[
                    pl.BlockSpec((1, C, HW_p), lambda n: (n, 0, 0)),
                    pl.BlockSpec((C, C), lambda n: (0, 0)),
                    pl.BlockSpec((C, 1), lambda n: (0, 0)),
                ],
                out_specs=pl.BlockSpec((1, C, HW_p), lambda n: (n, 0, 0)),
            ),
            compiler_params=pltpu.CompilerParams(
                dimension_semantics=("parallel",),
                vmem_limit_bytes=_vmem_limit(fused_live)),
        )(xr, w, b.reshape(C, 1))
    else:
        T = _pick_hw_tile(HW_p, C, itemsize, vmem_budget_bytes)
        n_t = HW_p // T

        # Phase 1: spatial-tiled global-average-pool reduction (f32 accumulator,
        # reduction axis last / "arbitrary").
        pool_live = 2 * C * T * itemsize + 2 * C * 4
        psum = pl.pallas_call(
            _pool_kernel,
            out_shape=jax.ShapeDtypeStruct((N, C, 1), jnp.float32),
            grid_spec=pltpu.PrefetchScalarGridSpec(
                num_scalar_prefetch=0,
                grid=(N, n_t),
                in_specs=[pl.BlockSpec((1, C, T), lambda n, t: (n, 0, t))],
                out_specs=pl.BlockSpec((1, C, 1), lambda n, t: (n, 0, 0)),
            ),
            compiler_params=pltpu.CompilerParams(
                dimension_semantics=("parallel", "arbitrary"),
                vmem_limit_bytes=_vmem_limit(pool_live)),
        )(xr)

        # Phase 2: batched, lane-dense 1x1 conv + activation over all N at once.
        scale_live = 4 * N * C * 4 + 2 * C * C * w_itemsize + 2 * C * w_itemsize
        scale = pl.pallas_call(
            functools.partial(_scale_kernel, inv_hw=inv_hw, weight_mode=weight_mode),
            out_shape=jax.ShapeDtypeStruct((N, C), jnp.float32),
            grid_spec=pltpu.PrefetchScalarGridSpec(
                num_scalar_prefetch=0,
                grid=(1,),
                in_specs=[
                    pl.BlockSpec((N, C), lambda i: (0, 0)),
                    pl.BlockSpec((C, C), lambda i: (0, 0)),
                    pl.BlockSpec((1, C), lambda i: (0, 0)),
                ],
                out_specs=pl.BlockSpec((N, C), lambda i: (0, 0)),
            ),
            compiler_params=pltpu.CompilerParams(
                dimension_semantics=("arbitrary",),
                vmem_limit_bytes=_vmem_limit(scale_live)),
        )(psum.reshape(N, C), jnp.transpose(w), b.reshape(1, C))

        # Phase 3: spatial-tiled broadcast multiply kept in the native dtype.
        apply_live = 4 * C * T * itemsize + 2 * C * 4
        out = pl.pallas_call(
            _apply_kernel,
            out_shape=jax.ShapeDtypeStruct((N, C, HW_p), x.dtype),
            grid_spec=pltpu.PrefetchScalarGridSpec(
                num_scalar_prefetch=0,
                grid=(N, n_t),
                in_specs=[
                    pl.BlockSpec((1, C, T), lambda n, t: (n, 0, t)),
                    pl.BlockSpec((1, C, 1), lambda n, t: (n, 0, 0)),
                ],
                out_specs=pl.BlockSpec((1, C, T), lambda n, t: (n, 0, t)),
            ),
            compiler_params=pltpu.CompilerParams(
                dimension_semantics=("parallel", "parallel"),
                vmem_limit_bytes=_vmem_limit(apply_live)),
        )(xr, scale.reshape(N, C, 1))

    if HW_p != HW:
        out = out[:, :, :HW]
    return out.reshape(N, C, H, W)


# ------------------------------ reference ------------------------------------


def _reference(x, w, b, weight_mode='softmax'):
    pooled = jnp.mean(x.astype(jnp.float32), axis=(2, 3))            # (N, C)
    y = pooled @ w.astype(jnp.float32).T + b.astype(jnp.float32)     # (N, C)
    y = jax.nn.softmax(y, axis=1) if weight_mode == 'softmax' else jax.nn.sigmoid(y)
    return (y[:, :, None, None] * x.astype(jnp.float32)).astype(x.dtype)


if __name__ == "__main__":
    key = jax.random.PRNGKey(0)
    k_x, k_w, k_b, k_x2 = jax.random.split(key, 4)

    # Case 1: small SE block, fused single-pass path (HW = 256, a 128 multiple).
    N, C, H, W = 2, 4, 16, 16
    x = jax.random.normal(k_x, (N, C, H, W), dtype=jnp.float32)
    bound = 1.0 / math.sqrt(C)   # PyTorch Conv2d default init range (1x1 kernel)
    w = jax.random.uniform(k_w, (C, C), minval=-bound, maxval=bound, dtype=jnp.float32)
    b = jax.random.uniform(k_b, (C,), minval=-bound, maxval=bound, dtype=jnp.float32)

    out = jax.block_until_ready(channel_attention(x, w, b, weight_mode='softmax'))
    ref = _reference(x, w, b, 'softmax')
    assert out.shape == (N, C, H, W)
    assert jnp.allclose(out, ref, atol=1e-5, rtol=1e-5), "fused softmax mismatch"

    # Case 2: same inputs, forced through the tiled three-phase path (sigmoid).
    out2 = jax.block_until_ready(
        channel_attention(x, w, b, weight_mode='sigmoid', force_tiled=True))
    ref2 = _reference(x, w, b, 'sigmoid')
    assert jnp.allclose(out2, ref2, atol=1e-5, rtol=1e-5), "tiled sigmoid mismatch"

    # Case 3: spatial size NOT a multiple of 128 (12*12 = 144 -> padded to 256),
    # through both paths; checks padded lanes are excluded from the pooled mean.
    N3, C3, H3, W3 = 2, 8, 12, 12
    x3 = jax.random.normal(k_x2, (N3, C3, H3, W3), dtype=jnp.float32)
    k_w3, k_b3 = jax.random.split(k_w)
    bound3 = 1.0 / math.sqrt(C3)
    w3 = jax.random.uniform(k_w3, (C3, C3), minval=-bound3, maxval=bound3,
                            dtype=jnp.float32)
    b3 = jax.random.uniform(k_b3, (C3,), minval=-bound3, maxval=bound3,
                            dtype=jnp.float32)
    ref3 = _reference(x3, w3, b3, 'softmax')
    out3a = jax.block_until_ready(channel_attention(x3, w3, b3, weight_mode='softmax'))
    out3b = jax.block_until_ready(
        channel_attention(x3, w3, b3, weight_mode='softmax', force_tiled=True))
    assert jnp.allclose(out3a, ref3, atol=1e-5, rtol=1e-5), "fused padded mismatch"
    assert jnp.allclose(out3b, ref3, atol=1e-5, rtol=1e-5), "tiled padded mismatch"

    print("KERNEL_OK")
</pallas_src>

<mosaic_0001>
module attributes {stable_mosaic.version = 11 : i64} {
  func.func @_fused_kernel(%arg0: i32, %arg1: memref<1x4x256xf32, #tpu.memory_space<vmem>>, %arg2: memref<4x4xf32, #tpu.memory_space<vmem>>, %arg3: memref<4x1xf32, #tpu.memory_space<vmem>>, %arg4: memref<1x4x256xf32, #tpu.memory_space<vmem>>) attributes {dimension_semantics = [#tpu.dimension_semantics<parallel>], iteration_bounds = array<i64: 2>, scalar_prefetch = 0 : i64, scratch_operands = 0 : i64, tpu.core_type = #tpu.core_type<tc>, window_params = [{transform_indices = @transform_0, window_bounds = array<i64: 1, 4, 256>}, {pipeline_mode = #tpu.pipeline_mode<synchronous>, transform_indices = @transform_1, window_bounds = array<i64: 4, 4>}, {pipeline_mode = #tpu.pipeline_mode<synchronous>, transform_indices = @transform_2, window_bounds = array<i64: 4, 1>}, {transform_indices = @transform_3, window_bounds = array<i64: 1, 4, 256>}]} {
    %c0 = arith.constant 0 : index
    %c0_0 = arith.constant 0 : index
    %c0_1 = arith.constant 0 : index
    %0 = vector.load %arg1[%c0, %c0_0, %c0_1] : memref<1x4x256xf32, #tpu.memory_space<vmem>>, vector<1x4x256xf32>
    %1 = vector.shape_cast %0 : vector<1x4x256xf32> to vector<4x256xf32>
    %cst = arith.constant dense<0.000000e+00> : vector<4xf32>
    %2 = vector.multi_reduction <add>, %1, %cst [1] : vector<4x256xf32> to vector<4xf32>
    %3 = vector.shape_cast %2 : vector<4xf32> to vector<4x1xf32>
    %cst_2 = arith.constant 3.906250e-03 : f32
    %4 = vector.broadcast %cst_2 : f32 to vector<4x1xf32>
    %5 = arith.mulf %3, %4 : vector<4x1xf32>
    %c0_3 = arith.constant 0 : index
    %c0_4 = arith.constant 0 : index
    %6 = vector.load %arg2[%c0_3, %c0_4] : memref<4x4xf32, #tpu.memory_space<vmem>>, vector<4x4xf32>
    %cst_5 = arith.constant dense<0.000000e+00> : vector<4x1xf32>
    %7 = tpu.matmul %6, %5, %cst_5 {dimension_numbers = #tpu.dot_dimension_numbers<[1], [0], [0], [1], [0, 0, 1, 1], [], []>} : vector<4x4xf32>, vector<4x1xf32>, vector<4x1xf32> -> vector<4x1xf32>
    %c0_6 = arith.constant 0 : index
    %c0_7 = arith.constant 0 : index
    %8 = vector.load %arg3[%c0_6, %c0_7] : memref<4x1xf32, #tpu.memory_space<vmem>>, vector<4x1xf32>
    %9 = arith.addf %7, %8 : vector<4x1xf32>
    %cst_8 = arith.constant dense<0xFF800000> : vector<1xf32>
    %10 = vector.multi_reduction <maximumf>, %9, %cst_8 [0] : vector<4x1xf32> to vector<1xf32>
    %11 = vector.shape_cast %10 : vector<1xf32> to vector<1x1xf32>
    %12 = vector.broadcast %11 : vector<1x1xf32> to vector<4x1xf32>
    %13 = arith.subf %9, %12 : vector<4x1xf32>
    %14 = math.exp %13 : vector<4x1xf32>
    %cst_9 = arith.constant dense<0.000000e+00> : vector<1xf32>
    %15 = vector.multi_reduction <add>, %14, %cst_9 [0] : vector<4x1xf32> to vector<1xf32>
    %16 = vector.shape_cast %15 : vector<1xf32> to vector<1x1xf32>
    %17 = tpu.reciprocal %16 {approx = true} : vector<1x1xf32> -> vector<1x1xf32>
    %18 = arith.mulf %16, %17 : vector<1x1xf32>
    %cst_10 = arith.constant 2.000000e+00 : f32
    %19 = vector.broadcast %cst_10 : f32 to vector<1x1xf32>
    %20 = arith.subf %19, %18 : vector<1x1xf32>
    %21 = arith.mulf %17, %20 : vector<1x1xf32>
    %22 = arith.mulf %16, %21 : vector<1x1xf32>
    %cst_11 = arith.constant 2.000000e+00 : f32
    %23 = vector.broadcast %cst_11 : f32 to vector<1x1xf32>
    %24 = arith.subf %23, %22 : vector<1x1xf32>
    %25 = arith.mulf %21, %24 : vector<1x1xf32>
    %26 = vector.broadcast %25 : vector<1x1xf32> to vector<4x1xf32>
    %27 = arith.mulf %14, %26 : vector<4x1xf32>
    %28 = vector.broadcast %27 : vector<4x1xf32> to vector<4x256xf32>
    %29 = arith.mulf %1, %28 : vector<4x256xf32>
    %c0_12 = arith.constant 0 : index
    %c0_13 = arith.constant 0 : index
    %c0_14 = arith.constant 0 : index
    %30 = vector.load %arg4[%c0_12, %c0_13, %c0_14] : memref<1x4x256xf32, #tpu.memory_space<vmem>>, vector<1x4x256xf32>
    %31 = vector.shape_cast %30 : vector<1x4x256xf32> to vector<4x256xf32>
    %32 = vector.shape_cast %29 : vector<4x256xf32> to vector<1x4x256xf32>
    tpu.vector_store %arg4[%c0_12, %c0_13, %c0_14], %32 {strides = array<i32>} : memref<1x4x256xf32, #tpu.memory_space<vmem>>, vector<1x4x256xf32>,
    return
  }
  func.func @transform_0(%arg0: i32) -> (i32, i32, i32) {
    %c0_i32 = arith.constant 0 : i32
    %c0_i32_0 = arith.constant 0 : i32
    %c0_i32_1 = arith.constant 0 : i32
    return %arg0, %c0_i32, %c0_i32_0 : i32, i32, i32
  }
  func.func @transform_1(%arg0: i32) -> (i32, i32) {
    %c0_i32 = arith.constant 0 : i32
    %c0_i32_0 = arith.constant 0 : i32
    %c0_i32_1 = arith.constant 0 : i32
    return %c0_i32, %c0_i32_0 : i32, i32
  }
  func.func @transform_2(%arg0: i32) -> (i32, i32) {
    %c0_i32 = arith.constant 0 : i32
    %c0_i32_0 = arith.constant 0 : i32
    %c0_i32_1 = arith.constant 0 : i32
    return %c0_i32, %c0_i32_0 : i32, i32
  }
  func.func @transform_3(%arg0: i32) -> (i32, i32, i32) {
    %c0_i32 = arith.constant 0 : i32
    %c0_i32_0 = arith.constant 0 : i32
    %c0_i32_1 = arith.constant 0 : i32
    return %arg0, %c0_i32, %c0_i32_0 : i32, i32, i32
  }
}

</mosaic_0001>

<llo_original>
// kernel: tpu_custom_call.1
$region0: #{tpu_custom_call.1}
  #allocation0 [shape = 'u32[]', space=smem, size = 0x4, offset = 0x4, fixed_abs, tag = 'smem constant byte address 0x4 - core index']
  #allocation1 [shape = 'u32[144,128]{1,0:T(1,128)}', space=vmem, size = 0x12000, scoped, tag = 'internal scratch']
  %s0 = inlined_call_operand.hbm [shape: f32[2,4,256], index: 0, kind: input, shape index: {}]
  %s1 = inlined_call_operand.vmem [shape: f32[4,4], index: 1, kind: input, shape index: {}]
  %s2 = inlined_call_operand.vmem [shape: f32[4,1], index: 2, kind: input, shape index: {}]
  %s3 = inlined_call_operand.hbm [shape: f32[2,4,256], index: 3, kind: output, shape index: {}]
  %s4 = sld [smem:[#allocation0]]
  $region49: #{tpu_custom_call.1} parent=0
    _
  %s6 = ssub.s32 1, %s4
  %s7 = scalar_select 0, %s6, %s4
  $region1: #{tpu_custom_call.1} parent=0
    #allocation2 [shape = 'u8[8192]{0}', space=vmem, size = 0x2000, scoped, tag = 'input window, operand 0']
    #allocation3 [shape = 's32[2]{0}', space=sflag, size = 0x8, scoped, tag = 'scoped memory for tpu_custom_call.1']
    #allocation4 [shape = 's32[2]{0}', space=sflag, size = 0x8, scoped, tag = 'scoped memory for tpu_custom_call.1']
    #allocation5 [shape = 'u8[8192]{0}', space=vmem, size = 0x2000, scoped, tag = 'output window, operand 0']
    %8 = vsyncpa [#allocation3], 0
    %s9 = scalar_lea.sflag [#allocation3], 1
    %10 = vsyncpa %s9, 0
    %11 = vsyncpa [#allocation4], 0
    %s12 = scalar_lea.sflag [#allocation4], 1
    %13 = vsyncpa %s12, 0
    loop: start=0, step=1, limit=4
    $region2: #{tpu_custom_call.1} parent=1 // loop_pre_header
      _
    $region3: #{tpu_custom_call.1} parent=1 // loop_header
      %s15 = sphi 0, %s19
      %p16 = scmp.ge.s32.totalorder %s15, 4
      %s25 = sphi 0, %s27
      %s28 = sphi 0, %s25
      %s29 = sphi 0, %s28
      %s45 = sphi 0, %s29
      %s49 = sphi 0, %s49
      %s51 = sphi 0, %s49
      %s52 = sphi 0, %s51
      %s66 = sphi 0, %s52
      %s70 = sphi 0, %s70
      %s72 = sphi 0, %s70
      %s73 = sphi 0, %s72
      %s87 = sphi 0, %s73
      %s93 = sphi 0, %s95
      %s96 = sphi 0, %s93
      %s97 = sphi 0, %s96
      %s113 = sphi 0, %s97
    $region4: #{tpu_custom_call.1} parent=1 // loop_header_branch
      %18 = sbr.rel (%p16) target = $region8
    $region5: #{tpu_custom_call.1} parent=1 // loop_body
      %s20 = ssub.s32 %s15, 1
      %s21 = ssub.s32 %s15, 2
      %s22 = sadd.s32 %s15, 1
      %s23 = ssub.s32 %s15, %s22
      %p24 = scmp.eq.s32.totalorder %s23, 0
      %s26 = sadd.s32 %s25, 1
      %s27 = scalar_select %p24, %s25, %s26
      %p30 = pneg %p24
      %p31 = scmp.eq.s32.totalorder %s15, 1
      %p32 = por %p30, %p31
      %p33 = scmp.ne.s32.totalorder %s25, %s28
      %p34 = scmp.eq.s32.totalorder %s15, 0
      %p35 = por %p33, %p34
      %p36 = scmp.ne.s32.totalorder %s25, %s28
      %p37 = scmp.eq.s32.totalorder %s20, 1
      %p38 = por %p36, %p37
      %p39 = scmp.ne.s32.totalorder %s28, %s29
      %p40 = scmp.eq.s32.totalorder %s20, 0
      %p41 = por %p39, %p40
      %p42 = scmp.ne.s32.totalorder %s28, %s29
      %p43 = scmp.eq.s32.totalorder %s21, 1
      %p44 = por %p42, %p43
      %p46 = scmp.ne.s32.totalorder %s29, %s45
      %p47 = scmp.eq.s32.totalorder %s21, 0
      %p48 = por %p46, %p47
      %s50 = sadd.s32 %s49, 1
      %p53 = scmp.eq.s32.totalorder %s15, 1
      %p54 = scmp.ne.s32.totalorder %s49, %s51
      %p55 = scmp.eq.s32.totalorder %s15, 0
      %p56 = por %p54, %p55
      %p57 = scmp.ne.s32.totalorder %s49, %s51
      %p58 = scmp.eq.s32.totalorder %s20, 1
      %p59 = por %p57, %p58
      %p60 = scmp.ne.s32.totalorder %s51, %s52
      %p61 = scmp.eq.s32.totalorder %s20, 0
      %p62 = por %p60, %p61
      %p63 = scmp.ne.s32.totalorder %s51, %s52
      %p64 = scmp.eq.s32.totalorder %s21, 1
      %p65 = por %p63, %p64
      %p67 = scmp.ne.s32.totalorder %s52, %s66
      %p68 = scmp.eq.s32.totalorder %s21, 0
      %p69 = por %p67, %p68
      %s71 = sadd.s32 %s70, 1
      %p74 = scmp.eq.s32.totalorder %s15, 1
      %p75 = scmp.ne.s32.totalorder %s70, %s72
      %p76 = scmp.eq.s32.totalorder %s15, 0
      %p77 = por %p75, %p76
      %p78 = scmp.ne.s32.totalorder %s70, %s72
      %p79 = scmp.eq.s32.totalorder %s20, 1
      %p80 = por %p78, %p79
      %p81 = scmp.ne.s32.totalorder %s72, %s73
      %p82 = scmp.eq.s32.totalorder %s20, 0
      %p83 = por %p81, %p82
      %p84 = scmp.ne.s32.totalorder %s72, %s73
      %p85 = scmp.eq.s32.totalorder %s21, 1
      %p86 = por %p84, %p85
      %p88 = scmp.ne.s32.totalorder %s73, %s87
      %p89 = scmp.eq.s32.totalorder %s21, 0
      %p90 = por %p88, %p89
      %s91 = ssub.s32 %s15, %s22
      %p92 = scmp.eq.s32.totalorder %s91, 0
      %s94 = sadd.s32 %s93, 1
      %s95 = scalar_select %p92, %s93, %s94
      %p98 = pneg %p92
      %p99 = scmp.eq.s32.totalorder %s15, 1
      %p100 = por %p98, %p99
      %p101 = scmp.ne.s32.totalorder %s93, %s96
      %p102 = scmp.eq.s32.totalorder %s15, 0
      %p103 = por %p101, %p102
      %p104 = scmp.ne.s32.totalorder %s93, %s96
      %p105 = scmp.eq.s32.totalorder %s20, 1
      %p106 = por %p104, %p105
      %p107 = scmp.ne.s32.totalorder %s96, %s97
      %p108 = scmp.eq.s32.totalorder %s20, 0
      %p109 = por %p107, %p108
      %p110 = scmp.ne.s32.totalorder %s96, %s97
      %p111 = scmp.eq.s32.totalorder %s21, 1
      %p112 = por %p110, %p111
      %p114 = scmp.ne.s32.totalorder %s97, %s113
      %p115 = scmp.eq.s32.totalorder %s21, 0
      %p116 = por %p114, %p115
      %p117 = scmp.le.s32.totalorder 1, %s15
      %p118 = scmp.lt.s32.totalorder %s15, 3
      %p119 = pnand %p117, %p118
      %p120 = pneg %p119
      // Predicated region
      $region9: #{tpu_custom_call.1} parent=5 // pred_check
        _
      $region10: #{tpu_custom_call.1} parent=5 // pred_check_branch
        %122 = sbr.rel (%p119) target = $region12
      $region11: #{tpu_custom_call.1} parent=5 // pred_region
        %s123 = ssub.s32 %s15, 1
        // Predicated region
        $region13: #{tpu_custom_call.1} parent=11 // pred_check
          %p124 = pneg %p62
        $region14: #{tpu_custom_call.1} parent=11 // pred_check_branch
          %126 = sbr.rel (%p124) target = $region16
        $region15: #{tpu_custom_call.1} parent=11 // pred_region
          _
        $region16: #{tpu_custom_call.1} parent=11 // pred_fallthru
          _
        // Predicated region
        $region17: #{tpu_custom_call.1} parent=11 // pred_check
          %p127 = pneg %p83
        $region18: #{tpu_custom_call.1} parent=11 // pred_check_branch
          %129 = sbr.rel (%p127) target = $region20
        $region19: #{tpu_custom_call.1} parent=11 // pred_region
          _
        $region20: #{tpu_custom_call.1} parent=11 // pred_fallthru
          _
      $region12: #{tpu_custom_call.1} parent=5 // pred_fallthru
        _
      %p130 = scmp.lt.s32.totalorder %s15, 2
      // Predicated region
      $region21: #{tpu_custom_call.1} parent=5 // pred_check
        %p131 = pneg %p130
      $region22: #{tpu_custom_call.1} parent=5 // pred_check_branch
        %133 = sbr.rel (%p131) target = $region24
      $region23: #{tpu_custom_call.1} parent=5 // pred_region
        // Predicated region
        $region25: #{tpu_custom_call.1} parent=23 // pred_check
          %p134 = pneg %p35
        $region26: #{tpu_custom_call.1} parent=23 // pred_check_branch
          %136 = sbr.rel (%p134) target = $region28
        $region27: #{tpu_custom_call.1} parent=23 // pred_region
          %s137 = sand.u32 %s25, 1
          %s138 = scalar_lea.sflag [#allocation3], %s137
          %s139 = sand.u32 %s25, 1
          %s140 = smul.addr %s139, 8
          %s141 = scalar_lea.vmem [#allocation2], %s140
          %s143 = ssub.s32 128, 128
          %144 = vsyncadd %s138, %s143
          %s145 = smul.addr %s15, 2
          %s146 = smul.addr %s145, 64
          %s147 = scalar_lea.hbm %s0, %s146
          %s149 = sshll.u32 %s141, 4
          %s150 = int_to_ptr.vmem [resolvable:$true] %s149
          %152 = dma.hbm_to_vmem [thread:$0]  %s147, 128, %s150, %s138
        $region28: #{tpu_custom_call.1} parent=23 // pred_fallthru
          _
      $region24: #{tpu_custom_call.1} parent=5 // pred_fallthru
        _
      %p153 = scmp.le.s32.totalorder 1, %s15
      %p154 = scmp.lt.s32.totalorder %s15, 3
      %p155 = pnand %p153, %p154
      %p156 = pneg %p155
      // Predicated region
      $region29: #{tpu_custom_call.1} parent=5 // pred_check
        _
      $region30: #{tpu_custom_call.1} parent=5 // pred_check_branch
        %158 = sbr.rel (%p155) target = $region32
      $region31: #{tpu_custom_call.1} parent=5 // pred_region
        %s159 = ssub.s32 %s15, 1
        %s160 = sand.u32 %s28, 1
        %s161 = scalar_lea.sflag [#allocation3], %s160
        %s162 = sand.u32 %s28, 1
        %s163 = smul.addr %s162, 8
        %s164 = scalar_lea.vmem [#allocation2], %s163
        // Predicated region
        $region33: #{tpu_custom_call.1} parent=31 // pred_check
          %p165 = pneg %p41
        $region34: #{tpu_custom_call.1} parent=31 // pred_check_branch
          %167 = sbr.rel (%p165) target = $region36
        $region35: #{tpu_custom_call.1} parent=31 // pred_region
          %168 = dma.done %s161, 128
        $region36: #{tpu_custom_call.1} parent=31 // pred_fallthru
          _
        %s169 = sand.u32 %s28, 1
        %s170 = scalar_lea.sflag [#allocation3], %s169
        %s171 = sand.u32 %s28, 1
        %s172 = smul.addr %s171, 8
        %s173 = scalar_lea.vmem [#allocation2], %s172
        %p174 = pneg %p41
        %p175 = pneg %p38
        %p176 = pneg %p62
        %p177 = pneg %p59
        %p178 = pneg %p83
        %p179 = pneg %p80
        %p180 = pneg %p109
        %p181 = pneg %p106
        %s182 = sand.u32 %s96, 1
        %s183 = scalar_lea.sflag [#allocation4], %s182
        %s184 = sand.u32 %s96, 1
        %s185 = smul.addr %s184, 8
        %s186 = scalar_lea.vmem [#allocation5], %s185
        %v187 = vld [vmem:[%s164] sm:$0xff]
        %v189 = vcombine.high %v187, %v187
        %vm191 = vcmask 1043456
        %v192 = vsel %vm191, %v187, 0.0
        %v193 = vsel %vm191, %v189, 0.0
        %v194 = vadd.f32 %v192, %v193
        %195 = vadd.xlane.f32.xlu0 %v194
        %v196 = vpop.xlane.xlu0 %195
        %v197 = vmul.f32 %v196, 0.00390625
        %v198 = vld [vmem:[%s1] sm:$0xf]
        %v199 = vld [vmem:[%s2] sm:$0xf]
        %vm200 = vcmask 31744
        %v202 = vsel %vm200, %v198, 0
        %v205 = vsel %vm191, %v197, 0
        %207 = vmatprep.subr.mxu0 0.0
        %208 = vmatpush1.msra.mxu0 %v205
        %209 = vmatprep.subr.mxu0 0.0
        %210 = vmatpush1.msra.mxu0 0.0
        %211 = vmatprep.subr.mxu0 0.0
        %212 = vmatpush1.msra.mxu0 0.0
        %213 = vmatprep.subr.mxu0 0.0
        %214 = vmatpush1.msra.mxu0 0.0
        %215 = vmatprep.subr.mxu0 0.0
        %216 = vmatpush1.msra.mxu0 0.0
        %217 = vmatprep.subr.mxu0 0.0
        %218 = vmatpush1.msra.mxu0 0.0
        %219 = vmatprep.subr.mxu0 0.0
        %220 = vmatpush1.msra.mxu0 0.0
        %221 = vmatprep.subr.mxu0 0.0
        %222 = vmatpush1.msra.mxu0 0.0
        %223 = vmatprep.subr.mxu0 0.0
        %224 = vmatpush1.msra.mxu0 0.0
        %225 = vmatprep.subr.mxu0 0.0
        %226 = vmatpush1.msra.mxu0 0.0
        %227 = vmatprep.subr.mxu0 0.0
        %228 = vmatpush1.msra.mxu0 0.0
        %229 = vmatprep.subr.mxu0 0.0
        %230 = vmatpush1.msra.mxu0 0.0
        %231 = vmatprep.subr.mxu0 0.0
        %232 = vmatpush1.msra.mxu0 0.0
        %233 = vmatprep.subr.mxu0 0.0
        %234 = vmatpush1.msra.mxu0 0.0
        %235 = vmatprep.subr.mxu0 0.0
        %236 = vmatpush1.msra.mxu0 0.0
        %237 = vmatprep.subr.mxu0 0.0
        %238 = vmatpush1.msra.mxu0 0.0
        %239 = vmatprep.subr.mxu0 0.0
        %240 = vmatpush1.msra.mxu0 0.0
        %241 = vmatprep.subr.mxu0 0.0
        %242 = vmatpush1.msra.mxu0 0.0
        %243 = vmatprep.subr.mxu0 0.0
        %244 = vmatpush1.msra.mxu0 0.0
        %245 = vmatprep.subr.mxu0 0.0
        %246 = vmatpush1.msra.mxu0 0.0
        %247 = vmatprep.subr.mxu0 0.0
        %248 = vmatpush1.msra.mxu0 0.0
        %249 = vmatprep.subr.mxu0 0.0
        %250 = vmatpush1.msra.mxu0 0.0
        %251 = vmatprep.subr.mxu0 0.0
        %252 = vmatpush1.msra.mxu0 0.0
        %253 = vmatprep.subr.mxu0 0.0
        %254 = vmatpush1.msra.mxu0 0.0
        %255 = vmatprep.subr.mxu0 0.0
        %256 = vmatpush1.msra.mxu0 0.0
        %257 = vmatprep.subr.mxu0 0.0
        %258 = vmatpush1.msra.mxu0 0.0
        %259 = vmatprep.subr.mxu0 0.0
        %260 = vmatpush1.msra.mxu0 0.0
        %261 = vmatprep.subr.mxu0 0.0
        %262 = vmatpush1.msra.mxu0 0.0
        %263 = vmatprep.subr.mxu0 0.0
        %264 = vmatpush1.msra.mxu0 0.0
        %265 = vmatprep.subr.mxu0 0.0
        %266 = vmatpush1.msra.mxu0 0.0
        %267 = vmatprep.subr.mxu0 0.0
        %268 = vmatpush1.msra.mxu0 0.0
        %269 = vmatprep.subr.mxu0 0.0
        %270 = vmatpush1.msra.mxu0 0.0
        %271 = vmatprep.mubr.f32.mxu0 0.0
        %272 = vmatmul.mubr.f32.gmra.mrb[0].mxu0 %v202
        %v273 = vpop.f32.mrb[0].mxu0
        %v274 = vadd.f32 %v199, %v273
        %v275 = vpop.f32.mrb[0].mxu0
        %276 = vdwg.mxu0
        %vm277 = vcmask 3072
        %v278 = vsel %vm277, %v274, -inf
        %v279 = vrot.slane %v278, 4
        %v280 = vmax.f32 %v278, %v279
        %v281 = vrot.slane %v280, 2
        %v282 = vmax.f32 %v280, %v281
        %v283 = vrot.slane %v282, 1
        %v284 = vmax.f32 %v282, %v283
        %v285 = vsub.f32 %v274, %v284
        %v286 = vmul.f32 %v285, 1.442695
        %v287 = vpow.pop %v286
        %v288 = vsel %vm277, %v287, 0.0
        %v289 = vrot.slane %v288, 4
        %v290 = vadd.f32 %v288, %v289
        %v291 = vrot.slane %v290, 2
        %v292 = vadd.f32 %v290, %v291
        %v293 = vrot.slane %v292, 1
        %v294 = vadd.f32 %v292, %v293
        %v295 = vrcp.pop %v294
        %v296 = vmul.f32 %v294, %v295
        %v297 = vsub.f32 2.0, %v296
        %v298 = vmul.f32 %v295, %v297
        %v299 = vmul.f32 %v294, %v298
        %v300 = vsub.f32 2.0, %v299
        %v301 = vmul.f32 %v298, %v300
        %v302 = vmul.f32 %v287, %v301
        %304 = vset.pattern.permute.xlu0 0
        %305 = vperm.xlu0 %304, %v302
        %v306 = vpop.permute.xlu0 %305
        %v308 = vunpack.c.l.s4 839922192
        %v309 = vunpack.c.0.s8 %v308
        %v310 = vlaneseq
        %v311 = vshrl.u32 %v310, 7
        %v312 = vsub.s32 %v309, %v311
        %v313 = vrot.slane %v306, %v312
        %v315 = vmul.f32 %v187, %v313
        %316 = vst [vmem:[%s186] sm:$0xff] %v315
        %s317 = sand.u32 %s96, 1
        %s318 = scalar_lea.sflag [#allocation4], %s317
        %s319 = sand.u32 %s96, 1
        %s320 = smul.addr %s319, 8
        %s321 = scalar_lea.vmem [#allocation5], %s320
        // Predicated region
        $region37: #{tpu_custom_call.1} parent=31 // pred_check
          %p322 = pneg %p106
        $region38: #{tpu_custom_call.1} parent=31 // pred_check_branch
          %324 = sbr.rel (%p322) target = $region40
        $region39: #{tpu_custom_call.1} parent=31 // pred_region
          %s326 = ssub.s32 128, 128
          %327 = vsyncadd %s318, %s326
          %s328 = smul.addr %s20, 2
          %s329 = smul.addr %s328, 64
          %s330 = scalar_lea.hbm %s3, %s329
          %s332 = sshll.u32 %s321, 4
          %s333 = int_to_ptr.vmem [resolvable:$true] %s332
          %335 = dma.vmem_to_hbm [thread:$0]  %s333, 128, %s330, %s318
        $region40: #{tpu_custom_call.1} parent=31 // pred_fallthru
          _
      $region32: #{tpu_custom_call.1} parent=5 // pred_fallthru
        _
      %p336 = scmp.le.s32.totalorder 2, %s15
      // Predicated region
      $region41: #{tpu_custom_call.1} parent=5 // pred_check
        %p337 = pneg %p336
      $region42: #{tpu_custom_call.1} parent=5 // pred_check_branch
        %339 = sbr.rel (%p337) target = $region44
      $region43: #{tpu_custom_call.1} parent=5 // pred_region
        %s340 = ssub.s32 %s15, 2
        // Predicated region
        $region45: #{tpu_custom_call.1} parent=43 // pred_check
          %p341 = pneg %p112
        $region46: #{tpu_custom_call.1} parent=43 // pred_check_branch
          %343 = sbr.rel (%p341) target = $region48
        $region47: #{tpu_custom_call.1} parent=43 // pred_region
          %s344 = sand.u32 %s97, 1
          %s345 = scalar_lea.sflag [#allocation4], %s344
          %s346 = sand.u32 %s97, 1
          %s347 = smul.addr %s346, 8
          %s348 = scalar_lea.vmem [#allocation5], %s347
          %349 = dma.done %s345, 128
        $region48: #{tpu_custom_call.1} parent=43 // pred_fallthru
          _
      $region44: #{tpu_custom_call.1} parent=5 // pred_fallthru
        _
    $region6: #{tpu_custom_call.1} parent=1 // loop_footer
      %s19 = sadd.s32 1, %s15
    $region7: #{tpu_custom_call.1} parent=1 // loop_footer_branch
      %14 = sbr.rel target = $region3
    $region8: #{tpu_custom_call.1} parent=1 // loop_exit
      _
    %350 = vsyncpa [#allocation3], 1
    %s351 = scalar_lea.sflag [#allocation3], 1
    %352 = vsyncpa %s351, 1
    %353 = vsyncpa [#allocation4], 1
    %s354 = scalar_lea.sflag [#allocation4], 1
    %355 = vsyncpa %s354, 1

</llo_original>
